<compile_context>
chip_gen: v7x
topology: tpu7x:2x2x1
jax: 0.10.0
libtpu: 0.0.40
codegen_flags: <defaults>
</compile_context>

<pallas_src>
import functools

import jax
import jax.numpy as jnp
from jax.experimental import pallas as pl
from jax.experimental.pallas import tpu as pltpu

NUM_LABELS = 2          # ProteinBertConfig(..., num_labels=2)
NPAD = 128              # lane-dense width for every matmul output / the probs output
VP = 32                 # padded bag-of-tokens width (protein vocab V + ones column, <= 32)

# weight-slab row layout (all offsets are multiples of 16 = bf16 sublane pack)
E_OFF = 0               # embedding block:   rows [0, 32)    -> (VP, 128)
W1_OFF = 32             # fused layer-1:     rows [32, 160)  -> (128, 128)  [teacher | student]
W2_OFF = 160            # fused classifier:  rows [160, 288) -> (128, 128)  block-diagonal
B2_OFF = 288            # classifier biases: row 288         -> (1, 128)
SLAB_ROWS = 304         # padded to a multiple of 16


def _distill_kernel(temperature, B, S, V, H, C,
                    tok_ref, slab_ref, probs_ref, loss_ref):
    f32 = jnp.float32
    inv_T = 1.0 / temperature                      # static python float
    IDS, MSK, LAB = 0, B * S, 2 * B * S            # offsets inside the packed SMEM vector

    # ---- in-kernel bag-of-tokens masked-mean pooling (de-materialized gather) ----
    vidx = jax.lax.broadcasted_iota(jnp.int32, (B, VP), 1)
    ridx = jax.lax.broadcasted_iota(jnp.int32, (B, VP), 0)
    counts = jnp.zeros((B, VP), f32)
    for b in range(B):                             # B, S static & tiny -> fully unrolled
        msum = f32(0.0)
        for s in range(S):
            msum = msum + tok_ref[MSK + b * S + s].astype(f32)
        inv_den = 1.0 / jnp.maximum(msum, 1.0)
        for s in range(S):
            tok = tok_ref[IDS + b * S + s]
            w = tok_ref[MSK + b * S + s].astype(f32) * inv_den
            hit = jnp.logical_and(ridx == b, vidx == tok).astype(f32)
            counts = counts + hit * w
    counts = jnp.where(vidx == V, 1.0, counts)     # bias-fold ones column (tokens are < V)

    # ---- fused teacher|student MXU chain on one resident bf16 weight slab ----
    emb = slab_ref[E_OFF:E_OFF + VP, :]                       # (32, 128)
    w1 = slab_ref[W1_OFF:W1_OFF + NPAD, :]                    # (128, 128)
    w2 = slab_ref[W2_OFF:W2_OFF + NPAD, :]                    # (128, 128)
    b2 = slab_ref[B2_OFF:B2_OFF + 1, :].astype(f32)           # (1, 128)

    pooled = jnp.dot(counts.astype(jnp.bfloat16), emb,
                     preferred_element_type=f32)              # (B, 128); col H carries 1
    hidden = jnp.tanh(jnp.dot(pooled.astype(jnp.bfloat16), w1,
                              preferred_element_type=f32))    # (B, 128); [0:H) teacher, [H:2H) student
    logits = jnp.dot(hidden.astype(jnp.bfloat16), w2,
                     preferred_element_type=f32) + b2         # (B, 128); [0:C) teacher, [C:2C) student

    # ---- forward output #1: softmax(student_logits, dim=1), stored lane-dense ----
    col = jax.lax.broadcasted_iota(jnp.int32, (B, NPAD), 1)
    s_mask = jnp.logical_and(col >= C, col < 2 * C)
    zs = jnp.where(s_mask, logits, f32(-1e30))
    m = jnp.max(zs, axis=1, keepdims=True)
    e = jnp.where(s_mask, jnp.exp(zs - m), 0.0)
    probs_ref[...] = e / jnp.sum(e, axis=1, keepdims=True)    # exact divide for returned probs

    # ---- distillation loss on narrow (B, C) views (negligible VPU work) ----
    tl = logits[:, 0:C]
    sl = logits[:, C:2 * C]

    def softmax_rows(z):
        mm = jnp.max(z, axis=1, keepdims=True)
        ee = jnp.exp(z - mm)
        return ee * pl.reciprocal(jnp.sum(ee, axis=1, keepdims=True), approx=True)

    s = softmax_rows(sl * inv_T)                              # (B, C)
    t = softmax_rows(tl * inv_T)                              # (B, C)

    # CrossEntropyLoss applies log_softmax to its input; the PyTorch module feeds it the
    # probability vector s (double softmax) — reproduced faithfully.
    sm = jnp.max(s, axis=1, keepdims=True)
    lse = jnp.log(jnp.sum(jnp.exp(s - sm), axis=1, keepdims=True)) + sm
    log_p = s - lse                                           # log_softmax(s)

    # one-hot(labels) built in-kernel from SMEM scalars
    cidx = jax.lax.broadcasted_iota(jnp.int32, (B, C), 1)
    bidx = jax.lax.broadcasted_iota(jnp.int32, (B, C), 0)
    lab_oh = jnp.zeros((B, C), f32)
    for b in range(B):
        lbl = tok_ref[LAB + b]
        lab_oh = lab_oh + jnp.logical_and(bidx == b, cidx == lbl).astype(f32)

    ce_hard = -jnp.sum(lab_oh * log_p, axis=1, keepdims=True)    # CE(s, labels) rows
    ce_soft = -jnp.sum(t * log_p, axis=1, keepdims=True)         # CE(s, t) rows

    eps = f32(1e-8)
    t_norm = jnp.maximum(jnp.sqrt(jnp.sum(t * t, axis=1, keepdims=True)), eps)
    s_norm = jnp.maximum(jnp.sqrt(jnp.sum(s * s, axis=1, keepdims=True)), eps)
    cos_rows = 1.0 - jnp.sum(t * s, axis=1, keepdims=True) * pl.reciprocal(t_norm * s_norm,
                                                                           approx=True)

    # scalar loss through SMEM (no padded VMEM output tile)
    loss_ref[0, 0] = jnp.sum(ce_hard + ce_soft + cos_rows) / (3.0 * B)


def prepare_params(params, num_labels=NUM_LABELS):
    """One-time packing of every weight/bias into a single lane-dense bf16 slab.

    Call once and reuse the result; this keeps all padding / dynamic-update-slice /
    convert HLOs out of the per-call forward path.
    """
    emb = params["embedding"]
    V, H = emb.shape
    C = num_labels
    assert V + 1 <= VP, "protein vocab + ones column must fit in 32 sublanes"
    assert H + 1 <= NPAD and 2 * H <= NPAD and 2 * C <= NPAD

    slab = jnp.zeros((SLAB_ROWS, NPAD), jnp.float32)
    # embedding block; ones-column carrier propagates the bias-fold 1 to pooled column H
    slab = slab.at[E_OFF:E_OFF + V, 0:H].set(emb)
    slab = slab.at[E_OFF + V, H].set(1.0)
    # fused [teacher | student] first layer, biases folded into row H (the carrier column)
    slab = slab.at[W1_OFF:W1_OFF + H, 0:H].set(params["wt1"])
    slab = slab.at[W1_OFF:W1_OFF + H, H:2 * H].set(params["ws1"])
    slab = slab.at[W1_OFF + H, 0:H].set(params["bt1"][0])
    slab = slab.at[W1_OFF + H, H:2 * H].set(params["bs1"][0])
    # block-diagonal fused classifier
    slab = slab.at[W2_OFF:W2_OFF + H, 0:C].set(params["wt2"])
    slab = slab.at[W2_OFF + H:W2_OFF + 2 * H, C:2 * C].set(params["ws2"])
    # classifier biases (bf16; zero in this harness so exact)
    slab = slab.at[B2_OFF, 0:C].set(params["bt2"][0])
    slab = slab.at[B2_OFF, C:2 * C].set(params["bs2"][0])
    return slab.astype(jnp.bfloat16)


@functools.partial(jax.jit, static_argnames=("temperature", "vocab", "hidden"))
def _forward_jit(input_ids, attention_mask, labels, slab, temperature, vocab, hidden):
    B, S = input_ids.shape
    C = NUM_LABELS
    # one tiny int32 SMEM operand: [input_ids | attention_mask | labels]
    tok = jnp.concatenate([input_ids.reshape(-1).astype(jnp.int32),
                           attention_mask.reshape(-1).astype(jnp.int32),
                           labels.reshape(-1).astype(jnp.int32)])

    kernel = functools.partial(_distill_kernel, float(temperature), B, S, vocab, hidden, C)
    probs_pad, loss = pl.pallas_call(
        kernel,
        out_shape=(jax.ShapeDtypeStruct((B, NPAD), jnp.float32),
                   jax.ShapeDtypeStruct((1, 1), jnp.float32)),
        in_specs=[pl.BlockSpec(memory_space=pltpu.MemorySpace.SMEM),   # tokens/mask/labels
                  pl.BlockSpec(memory_space=pltpu.MemorySpace.VMEM)],  # weight slab
        out_specs=(pl.BlockSpec(memory_space=pltpu.MemorySpace.VMEM),  # lane-dense probs
                   pl.BlockSpec(memory_space=pltpu.MemorySpace.SMEM)), # scalar loss
    )(tok, slab)

    return probs_pad[:, C:2 * C], loss[0, 0]


def distillator_forward(input_ids, attention_mask, labels, slab, *,
                        vocab, hidden, temperature=1.0):
    """Returns (student_probs (B, C), distillation loss scalar)."""
    if temperature < 1:
        raise ValueError(f"Temperature must be above 1, it cannot be {temperature}")
    return _forward_jit(input_ids, attention_mask, labels, slab,
                        float(temperature), int(vocab), int(hidden))


def init_params(key, vocab, hidden, num_labels=NUM_LABELS):
    ks = jax.random.split(key, 5)
    scale = 0.1
    return {
        "embedding": scale * jax.random.normal(ks[0], (vocab, hidden), jnp.float32),
        # teacher head
        "wt1": scale * jax.random.normal(ks[1], (hidden, hidden), jnp.float32),
        "bt1": jnp.zeros((1, hidden), jnp.float32),
        "wt2": scale * jax.random.normal(ks[2], (hidden, num_labels), jnp.float32),
        "bt2": jnp.zeros((1, num_labels), jnp.float32),
        # student head (distilled / independent synthetic params)
        "ws1": scale * jax.random.normal(ks[3], (hidden, hidden), jnp.float32),
        "bs1": jnp.zeros((1, hidden), jnp.float32),
        "ws2": scale * jax.random.normal(ks[4], (hidden, num_labels), jnp.float32),
        "bs2": jnp.zeros((1, num_labels), jnp.float32),
    }


if __name__ == "__main__":
    B, S, H, V = 2, 8, 32, 30  # batch, seq, hidden, protein vocab size

    key = jax.random.PRNGKey(0)
    kp, kid, klab = jax.random.split(key, 3)
    params = init_params(kp, V, H)

    # one-time weight packing (hoisted out of the forward; reuse across calls)
    slab = jax.block_until_ready(prepare_params(params))

    input_ids = jax.random.randint(kid, (B, S), 0, V, dtype=jnp.int32)
    attention_mask = jnp.ones((B, S), dtype=jnp.int32)
    labels = jax.random.randint(klab, (B,), 0, NUM_LABELS, dtype=jnp.int32)

    probs, loss = distillator_forward(input_ids, attention_mask, labels, slab,
                                      vocab=V, hidden=H, temperature=1.0)
    jax.block_until_ready((probs, loss))
    print("KERNEL_OK")
</pallas_src>

<mosaic_0001>
module attributes {stable_mosaic.version = 11 : i64} {
  func.func @_distill_kernel(%arg0: memref<34xi32, #tpu.memory_space<smem>>, %arg1: memref<304x128xbf16, #tpu.memory_space<vmem>>, %arg2: memref<2x128xf32, #tpu.memory_space<vmem>>, %arg3: memref<1x1xf32, #tpu.memory_space<smem>>) attributes {dimension_semantics = [], scalar_prefetch = 0 : i64, scratch_operands = 0 : i64, tpu.core_type = #tpu.core_type<tc>} {
    %0 = tpu.iota {dimensions = array<i32: 1>} : vector<2x32xi32>
    %1 = tpu.iota {dimensions = array<i32: 0>} : vector<2x32xi32>
    %cst = arith.constant 0.000000e+00 : f32
    %2 = vector.broadcast %cst : f32 to vector<2x32xf32>
    %c16 = arith.constant 16 : index
    %3 = memref.load %arg0[%c16] : memref<34xi32, #tpu.memory_space<smem>>
    %4 = arith.sitofp %3 : i32 to f32
    %cst_0 = arith.constant 0.000000e+00 : f32
    %5 = arith.addf %cst_0, %4 : f32
    %c17 = arith.constant 17 : index
    %6 = memref.load %arg0[%c17] : memref<34xi32, #tpu.memory_space<smem>>
    %7 = arith.sitofp %6 : i32 to f32
    %8 = arith.addf %5, %7 : f32
    %c18 = arith.constant 18 : index
    %9 = memref.load %arg0[%c18] : memref<34xi32, #tpu.memory_space<smem>>
    %10 = arith.sitofp %9 : i32 to f32
    %11 = arith.addf %8, %10 : f32
    %c19 = arith.constant 19 : index
    %12 = memref.load %arg0[%c19] : memref<34xi32, #tpu.memory_space<smem>>
    %13 = arith.sitofp %12 : i32 to f32
    %14 = arith.addf %11, %13 : f32
    %c20 = arith.constant 20 : index
    %15 = memref.load %arg0[%c20] : memref<34xi32, #tpu.memory_space<smem>>
    %16 = arith.sitofp %15 : i32 to f32
    %17 = arith.addf %14, %16 : f32
    %c21 = arith.constant 21 : index
    %18 = memref.load %arg0[%c21] : memref<34xi32, #tpu.memory_space<smem>>
    %19 = arith.sitofp %18 : i32 to f32
    %20 = arith.addf %17, %19 : f32
    %c22 = arith.constant 22 : index
    %21 = memref.load %arg0[%c22] : memref<34xi32, #tpu.memory_space<smem>>
    %22 = arith.sitofp %21 : i32 to f32
    %23 = arith.addf %20, %22 : f32
    %c23 = arith.constant 23 : index
    %24 = memref.load %arg0[%c23] : memref<34xi32, #tpu.memory_space<smem>>
    %25 = arith.sitofp %24 : i32 to f32
    %26 = arith.addf %23, %25 : f32
    %cst_1 = arith.constant 1.000000e+00 : f32
    %27 = arith.maximumf %26, %cst_1 : f32
    %cst_2 = arith.constant 1.000000e+00 : f32
    %28 = arith.divf %cst_2, %27 : f32
    %c0 = arith.constant 0 : index
    %29 = memref.load %arg0[%c0] : memref<34xi32, #tpu.memory_space<smem>>
    %c16_3 = arith.constant 16 : index
    %30 = memref.load %arg0[%c16_3] : memref<34xi32, #tpu.memory_space<smem>>
    %31 = arith.sitofp %30 : i32 to f32
    %32 = arith.mulf %31, %28 : f32
    %c0_i32 = arith.constant 0 : i32
    %33 = vector.broadcast %c0_i32 : i32 to vector<2x32xi32>
    %34 = arith.cmpi eq, %1, %33 : vector<2x32xi32>
    %35 = vector.broadcast %29 : i32 to vector<2x32xi32>
    %36 = arith.cmpi eq, %0, %35 : vector<2x32xi32>
    %37 = arith.andi %34, %36 : vector<2x32xi1>
    %38 = arith.extui %37 : vector<2x32xi1> to vector<2x32xi32>
    %39 = arith.sitofp %38 : vector<2x32xi32> to vector<2x32xf32>
    %40 = vector.broadcast %32 : f32 to vector<2x32xf32>
    %41 = arith.mulf %39, %40 : vector<2x32xf32>
    %42 = arith.addf %2, %41 : vector<2x32xf32>
    %c1 = arith.constant 1 : index
    %43 = memref.load %arg0[%c1] : memref<34xi32, #tpu.memory_space<smem>>
    %c17_4 = arith.constant 17 : index
    %44 = memref.load %arg0[%c17_4] : memref<34xi32, #tpu.memory_space<smem>>
    %45 = arith.sitofp %44 : i32 to f32
    %46 = arith.mulf %45, %28 : f32
    %c0_i32_5 = arith.constant 0 : i32
    %47 = vector.broadcast %c0_i32_5 : i32 to vector<2x32xi32>
    %48 = arith.cmpi eq, %1, %47 : vector<2x32xi32>
    %49 = vector.broadcast %43 : i32 to vector<2x32xi32>
    %50 = arith.cmpi eq, %0, %49 : vector<2x32xi32>
    %51 = arith.andi %48, %50 : vector<2x32xi1>
    %52 = arith.extui %51 : vector<2x32xi1> to vector<2x32xi32>
    %53 = arith.sitofp %52 : vector<2x32xi32> to vector<2x32xf32>
    %54 = vector.broadcast %46 : f32 to vector<2x32xf32>
    %55 = arith.mulf %53, %54 : vector<2x32xf32>
    %56 = arith.addf %42, %55 : vector<2x32xf32>
    %c2 = arith.constant 2 : index
    %57 = memref.load %arg0[%c2] : memref<34xi32, #tpu.memory_space<smem>>
    %c18_6 = arith.constant 18 : index
    %58 = memref.load %arg0[%c18_6] : memref<34xi32, #tpu.memory_space<smem>>
    %59 = arith.sitofp %58 : i32 to f32
    %60 = arith.mulf %59, %28 : f32
    %c0_i32_7 = arith.constant 0 : i32
    %61 = vector.broadcast %c0_i32_7 : i32 to vector<2x32xi32>
    %62 = arith.cmpi eq, %1, %61 : vector<2x32xi32>
    %63 = vector.broadcast %57 : i32 to vector<2x32xi32>
    %64 = arith.cmpi eq, %0, %63 : vector<2x32xi32>
    %65 = arith.andi %62, %64 : vector<2x32xi1>
    %66 = arith.extui %65 : vector<2x32xi1> to vector<2x32xi32>
    %67 = arith.sitofp %66 : vector<2x32xi32> to vector<2x32xf32>
    %68 = vector.broadcast %60 : f32 to vector<2x32xf32>
    %69 = arith.mulf %67, %68 : vector<2x32xf32>
    %70 = arith.addf %56, %69 : vector<2x32xf32>
    %c3 = arith.constant 3 : index
    %71 = memref.load %arg0[%c3] : memref<34xi32, #tpu.memory_space<smem>>
    %c19_8 = arith.constant 19 : index
    %72 = memref.load %arg0[%c19_8] : memref<34xi32, #tpu.memory_space<smem>>
    %73 = arith.sitofp %72 : i32 to f32
    %74 = arith.mulf %73, %28 : f32
    %c0_i32_9 = arith.constant 0 : i32
    %75 = vector.broadcast %c0_i32_9 : i32 to vector<2x32xi32>
    %76 = arith.cmpi eq, %1, %75 : vector<2x32xi32>
    %77 = vector.broadcast %71 : i32 to vector<2x32xi32>
    %78 = arith.cmpi eq, %0, %77 : vector<2x32xi32>
    %79 = arith.andi %76, %78 : vector<2x32xi1>
    %80 = arith.extui %79 : vector<2x32xi1> to vector<2x32xi32>
    %81 = arith.sitofp %80 : vector<2x32xi32> to vector<2x32xf32>
    %82 = vector.broadcast %74 : f32 to vector<2x32xf32>
    %83 = arith.mulf %81, %82 : vector<2x32xf32>
    %84 = arith.addf %70, %83 : vector<2x32xf32>
    %c4 = arith.constant 4 : index
    %85 = memref.load %arg0[%c4] : memref<34xi32, #tpu.memory_space<smem>>
    %c20_10 = arith.constant 20 : index
    %86 = memref.load %arg0[%c20_10] : memref<34xi32, #tpu.memory_space<smem>>
    %87 = arith.sitofp %86 : i32 to f32
    %88 = arith.mulf %87, %28 : f32
    %c0_i32_11 = arith.constant 0 : i32
    %89 = vector.broadcast %c0_i32_11 : i32 to vector<2x32xi32>
    %90 = arith.cmpi eq, %1, %89 : vector<2x32xi32>
    %91 = vector.broadcast %85 : i32 to vector<2x32xi32>
    %92 = arith.cmpi eq, %0, %91 : vector<2x32xi32>
    %93 = arith.andi %90, %92 : vector<2x32xi1>
    %94 = arith.extui %93 : vector<2x32xi1> to vector<2x32xi32>
    %95 = arith.sitofp %94 : vector<2x32xi32> to vector<2x32xf32>
    %96 = vector.broadcast %88 : f32 to vector<2x32xf32>
    %97 = arith.mulf %95, %96 : vector<2x32xf32>
    %98 = arith.addf %84, %97 : vector<2x32xf32>
    %c5 = arith.constant 5 : index
    %99 = memref.load %arg0[%c5] : memref<34xi32, #tpu.memory_space<smem>>
    %c21_12 = arith.constant 21 : index
    %100 = memref.load %arg0[%c21_12] : memref<34xi32, #tpu.memory_space<smem>>
    %101 = arith.sitofp %100 : i32 to f32
    %102 = arith.mulf %101, %28 : f32
    %c0_i32_13 = arith.constant 0 : i32
    %103 = vector.broadcast %c0_i32_13 : i32 to vector<2x32xi32>
    %104 = arith.cmpi eq, %1, %103 : vector<2x32xi32>
    %105 = vector.broadcast %99 : i32 to vector<2x32xi32>
    %106 = arith.cmpi eq, %0, %105 : vector<2x32xi32>
    %107 = arith.andi %104, %106 : vector<2x32xi1>
    %108 = arith.extui %107 : vector<2x32xi1> to vector<2x32xi32>
    %109 = arith.sitofp %108 : vector<2x32xi32> to vector<2x32xf32>
    %110 = vector.broadcast %102 : f32 to vector<2x32xf32>
    %111 = arith.mulf %109, %110 : vector<2x32xf32>
    %112 = arith.addf %98, %111 : vector<2x32xf32>
    %c6 = arith.constant 6 : index
    %113 = memref.load %arg0[%c6] : memref<34xi32, #tpu.memory_space<smem>>
    %c22_14 = arith.constant 22 : index
    %114 = memref.load %arg0[%c22_14] : memref<34xi32, #tpu.memory_space<smem>>
    %115 = arith.sitofp %114 : i32 to f32
    %116 = arith.mulf %115, %28 : f32
    %c0_i32_15 = arith.constant 0 : i32
    %117 = vector.broadcast %c0_i32_15 : i32 to vector<2x32xi32>
    %118 = arith.cmpi eq, %1, %117 : vector<2x32xi32>
    %119 = vector.broadcast %113 : i32 to vector<2x32xi32>
    %120 = arith.cmpi eq, %0, %119 : vector<2x32xi32>
    %121 = arith.andi %118, %120 : vector<2x32xi1>
    %122 = arith.extui %121 : vector<2x32xi1> to vector<2x32xi32>
    %123 = arith.sitofp %122 : vector<2x32xi32> to vector<2x32xf32>
    %124 = vector.broadcast %116 : f32 to vector<2x32xf32>
    %125 = arith.mulf %123, %124 : vector<2x32xf32>
    %126 = arith.addf %112, %125 : vector<2x32xf32>
    %c7 = arith.constant 7 : index
    %127 = memref.load %arg0[%c7] : memref<34xi32, #tpu.memory_space<smem>>
    %c23_16 = arith.constant 23 : index
    %128 = memref.load %arg0[%c23_16] : memref<34xi32, #tpu.memory_space<smem>>
    %129 = arith.sitofp %128 : i32 to f32
    %130 = arith.mulf %129, %28 : f32
    %c0_i32_17 = arith.constant 0 : i32
    %131 = vector.broadcast %c0_i32_17 : i32 to vector<2x32xi32>
    %132 = arith.cmpi eq, %1, %131 : vector<2x32xi32>
    %133 = vector.broadcast %127 : i32 to vector<2x32xi32>
    %134 = arith.cmpi eq, %0, %133 : vector<2x32xi32>
    %135 = arith.andi %132, %134 : vector<2x32xi1>
    %136 = arith.extui %135 : vector<2x32xi1> to vector<2x32xi32>
    %137 = arith.sitofp %136 : vector<2x32xi32> to vector<2x32xf32>
    %138 = vector.broadcast %130 : f32 to vector<2x32xf32>
    %139 = arith.mulf %137, %138 : vector<2x32xf32>
    %140 = arith.addf %126, %139 : vector<2x32xf32>
    %c24 = arith.constant 24 : index
    %141 = memref.load %arg0[%c24] : memref<34xi32, #tpu.memory_space<smem>>
    %142 = arith.sitofp %141 : i32 to f32
    %cst_18 = arith.constant 0.000000e+00 : f32
    %143 = arith.addf %cst_18, %142 : f32
    %c25 = arith.constant 25 : index
    %144 = memref.load %arg0[%c25] : memref<34xi32, #tpu.memory_space<smem>>
    %145 = arith.sitofp %144 : i32 to f32
    %146 = arith.addf %143, %145 : f32
    %c26 = arith.constant 26 : index
    %147 = memref.load %arg0[%c26] : memref<34xi32, #tpu.memory_space<smem>>
    %148 = arith.sitofp %147 : i32 to f32
    %149 = arith.addf %146, %148 : f32
    %c27 = arith.constant 27 : index
    %150 = memref.load %arg0[%c27] : memref<34xi32, #tpu.memory_space<smem>>
    %151 = arith.sitofp %150 : i32 to f32
    %152 = arith.addf %149, %151 : f32
    %c28 = arith.constant 28 : index
    %153 = memref.load %arg0[%c28] : memref<34xi32, #tpu.memory_space<smem>>
    %154 = arith.sitofp %153 : i32 to f32
    %155 = arith.addf %152, %154 : f32
    %c29 = arith.constant 29 : index
    %156 = memref.load %arg0[%c29] : memref<34xi32, #tpu.memory_space<smem>>
    %157 = arith.sitofp %156 : i32 to f32
    %158 = arith.addf %155, %157 : f32
    %c30 = arith.constant 30 : index
    %159 = memref.load %arg0[%c30] : memref<34xi32, #tpu.memory_space<smem>>
    %160 = arith.sitofp %159 : i32 to f32
    %161 = arith.addf %158, %160 : f32
    %c31 = arith.constant 31 : index
    %162 = memref.load %arg0[%c31] : memref<34xi32, #tpu.memory_space<smem>>
    %163 = arith.sitofp %162 : i32 to f32
    %164 = arith.addf %161, %163 : f32
    %cst_19 = arith.constant 1.000000e+00 : f32
    %165 = arith.maximumf %164, %cst_19 : f32
    %cst_20 = arith.constant 1.000000e+00 : f32
    %166 = arith.divf %cst_20, %165 : f32
    %c8 = arith.constant 8 : index
    %167 = memref.load %arg0[%c8] : memref<34xi32, #tpu.memory_space<smem>>
    %c24_21 = arith.constant 24 : index
    %168 = memref.load %arg0[%c24_21] : memref<34xi32, #tpu.memory_space<smem>>
    %169 = arith.sitofp %168 : i32 to f32
    %170 = arith.mulf %169, %166 : f32
    %c1_i32 = arith.constant 1 : i32
    %171 = vector.broadcast %c1_i32 : i32 to vector<2x32xi32>
    %172 = arith.cmpi eq, %1, %171 : vector<2x32xi32>
    %173 = vector.broadcast %167 : i32 to vector<2x32xi32>
    %174 = arith.cmpi eq, %0, %173 : vector<2x32xi32>
    %175 = arith.andi %172, %174 : vector<2x32xi1>
    %176 = arith.extui %175 : vector<2x32xi1> to vector<2x32xi32>
    %177 = arith.sitofp %176 : vector<2x32xi32> to vector<2x32xf32>
    %178 = vector.broadcast %170 : f32 to vector<2x32xf32>
    %179 = arith.mulf %177, %178 : vector<2x32xf32>
    %180 = arith.addf %140, %179 : vector<2x32xf32>
    %c9 = arith.constant 9 : index
    %181 = memref.load %arg0[%c9] : memref<34xi32, #tpu.memory_space<smem>>
    %c25_22 = arith.constant 25 : index
    %182 = memref.load %arg0[%c25_22] : memref<34xi32, #tpu.memory_space<smem>>
    %183 = arith.sitofp %182 : i32 to f32
    %184 = arith.mulf %183, %166 : f32
    %c1_i32_23 = arith.constant 1 : i32
    %185 = vector.broadcast %c1_i32_23 : i32 to vector<2x32xi32>
    %186 = arith.cmpi eq, %1, %185 : vector<2x32xi32>
    %187 = vector.broadcast %181 : i32 to vector<2x32xi32>
    %188 = arith.cmpi eq, %0, %187 : vector<2x32xi32>
    %189 = arith.andi %186, %188 : vector<2x32xi1>
    %190 = arith.extui %189 : vector<2x32xi1> to vector<2x32xi32>
    %191 = arith.sitofp %190 : vector<2x32xi32> to vector<2x32xf32>
    %192 = vector.broadcast %184 : f32 to vector<2x32xf32>
    %193 = arith.mulf %191, %192 : vector<2x32xf32>
    %194 = arith.addf %180, %193 : vector<2x32xf32>
    %c10 = arith.constant 10 : index
    %195 = memref.load %arg0[%c10] : memref<34xi32, #tpu.memory_space<smem>>
    %c26_24 = arith.constant 26 : index
    %196 = memref.load %arg0[%c26_24] : memref<34xi32, #tpu.memory_space<smem>>
    %197 = arith.sitofp %196 : i32 to f32
    %198 = arith.mulf %197, %166 : f32
    %c1_i32_25 = arith.constant 1 : i32
    %199 = vector.broadcast %c1_i32_25 : i32 to vector<2x32xi32>
    %200 = arith.cmpi eq, %1, %199 : vector<2x32xi32>
    %201 = vector.broadcast %195 : i32 to vector<2x32xi32>
    %202 = arith.cmpi eq, %0, %201 : vector<2x32xi32>
    %203 = arith.andi %200, %202 : vector<2x32xi1>
    %204 = arith.extui %203 : vector<2x32xi1> to vector<2x32xi32>
    %205 = arith.sitofp %204 : vector<2x32xi32> to vector<2x32xf32>
    %206 = vector.broadcast %198 : f32 to vector<2x32xf32>
    %207 = arith.mulf %205, %206 : vector<2x32xf32>
    %208 = arith.addf %194, %207 : vector<2x32xf32>
    %c11 = arith.constant 11 : index
    %209 = memref.load %arg0[%c11] : memref<34xi32, #tpu.memory_space<smem>>
    %c27_26 = arith.constant 27 : index
    %210 = memref.load %arg0[%c27_26] : memref<34xi32, #tpu.memory_space<smem>>
    %211 = arith.sitofp %210 : i32 to f32
    %212 = arith.mulf %211, %166 : f32
    %c1_i32_27 = arith.constant 1 : i32
    %213 = vector.broadcast %c1_i32_27 : i32 to vector<2x32xi32>
    %214 = arith.cmpi eq, %1, %213 : vector<2x32xi32>
    %215 = vector.broadcast %209 : i32 to vector<2x32xi32>
    %216 = arith.cmpi eq, %0, %215 : vector<2x32xi32>
    %217 = arith.andi %214, %216 : vector<2x32xi1>
    %218 = arith.extui %217 : vector<2x32xi1> to vector<2x32xi32>
    %219 = arith.sitofp %218 : vector<2x32xi32> to vector<2x32xf32>
    %220 = vector.broadcast %212 : f32 to vector<2x32xf32>
    %221 = arith.mulf %219, %220 : vector<2x32xf32>
    %222 = arith.addf %208, %221 : vector<2x32xf32>
    %c12 = arith.constant 12 : index
    %223 = memref.load %arg0[%c12] : memref<34xi32, #tpu.memory_space<smem>>
    %c28_28 = arith.constant 28 : index
    %224 = memref.load %arg0[%c28_28] : memref<34xi32, #tpu.memory_space<smem>>
    %225 = arith.sitofp %224 : i32 to f32
    %226 = arith.mulf %225, %166 : f32
    %c1_i32_29 = arith.constant 1 : i32
    %227 = vector.broadcast %c1_i32_29 : i32 to vector<2x32xi32>
    %228 = arith.cmpi eq, %1, %227 : vector<2x32xi32>
    %229 = vector.broadcast %223 : i32 to vector<2x32xi32>
    %230 = arith.cmpi eq, %0, %229 : vector<2x32xi32>
    %231 = arith.andi %228, %230 : vector<2x32xi1>
    %232 = arith.extui %231 : vector<2x32xi1> to vector<2x32xi32>
    %233 = arith.sitofp %232 : vector<2x32xi32> to vector<2x32xf32>
    %234 = vector.broadcast %226 : f32 to vector<2x32xf32>
    %235 = arith.mulf %233, %234 : vector<2x32xf32>
    %236 = arith.addf %222, %235 : vector<2x32xf32>
    %c13 = arith.constant 13 : index
    %237 = memref.load %arg0[%c13] : memref<34xi32, #tpu.memory_space<smem>>
    %c29_30 = arith.constant 29 : index
    %238 = memref.load %arg0[%c29_30] : memref<34xi32, #tpu.memory_space<smem>>
    %239 = arith.sitofp %238 : i32 to f32
    %240 = arith.mulf %239, %166 : f32
    %c1_i32_31 = arith.constant 1 : i32
    %241 = vector.broadcast %c1_i32_31 : i32 to vector<2x32xi32>
    %242 = arith.cmpi eq, %1, %241 : vector<2x32xi32>
    %243 = vector.broadcast %237 : i32 to vector<2x32xi32>
    %244 = arith.cmpi eq, %0, %243 : vector<2x32xi32>
    %245 = arith.andi %242, %244 : vector<2x32xi1>
    %246 = arith.extui %245 : vector<2x32xi1> to vector<2x32xi32>
    %247 = arith.sitofp %246 : vector<2x32xi32> to vector<2x32xf32>
    %248 = vector.broadcast %240 : f32 to vector<2x32xf32>
    %249 = arith.mulf %247, %248 : vector<2x32xf32>
    %250 = arith.addf %236, %249 : vector<2x32xf32>
    %c14 = arith.constant 14 : index
    %251 = memref.load %arg0[%c14] : memref<34xi32, #tpu.memory_space<smem>>
    %c30_32 = arith.constant 30 : index
    %252 = memref.load %arg0[%c30_32] : memref<34xi32, #tpu.memory_space<smem>>
    %253 = arith.sitofp %252 : i32 to f32
    %254 = arith.mulf %253, %166 : f32
    %c1_i32_33 = arith.constant 1 : i32
    %255 = vector.broadcast %c1_i32_33 : i32 to vector<2x32xi32>
    %256 = arith.cmpi eq, %1, %255 : vector<2x32xi32>
    %257 = vector.broadcast %251 : i32 to vector<2x32xi32>
    %258 = arith.cmpi eq, %0, %257 : vector<2x32xi32>
    %259 = arith.andi %256, %258 : vector<2x32xi1>
    %260 = arith.extui %259 : vector<2x32xi1> to vector<2x32xi32>
    %261 = arith.sitofp %260 : vector<2x32xi32> to vector<2x32xf32>
    %262 = vector.broadcast %254 : f32 to vector<2x32xf32>
    %263 = arith.mulf %261, %262 : vector<2x32xf32>
    %264 = arith.addf %250, %263 : vector<2x32xf32>
    %c15 = arith.constant 15 : index
    %265 = memref.load %arg0[%c15] : memref<34xi32, #tpu.memory_space<smem>>
    %c31_34 = arith.constant 31 : index
    %266 = memref.load %arg0[%c31_34] : memref<34xi32, #tpu.memory_space<smem>>
    %267 = arith.sitofp %266 : i32 to f32
    %268 = arith.mulf %267, %166 : f32
    %c1_i32_35 = arith.constant 1 : i32
    %269 = vector.broadcast %c1_i32_35 : i32 to vector<2x32xi32>
    %270 = arith.cmpi eq, %1, %269 : vector<2x32xi32>
    %271 = vector.broadcast %265 : i32 to vector<2x32xi32>
    %272 = arith.cmpi eq, %0, %271 : vector<2x32xi32>
    %273 = arith.andi %270, %272 : vector<2x32xi1>
    %274 = arith.extui %273 : vector<2x32xi1> to vector<2x32xi32>
    %275 = arith.sitofp %274 : vector<2x32xi32> to vector<2x32xf32>
    %276 = vector.broadcast %268 : f32 to vector<2x32xf32>
    %277 = arith.mulf %275, %276 : vector<2x32xf32>
    %278 = arith.addf %264, %277 : vector<2x32xf32>
    %c30_i32 = arith.constant 30 : i32
    %279 = vector.broadcast %c30_i32 : i32 to vector<2x32xi32>
    %280 = arith.cmpi eq, %0, %279 : vector<2x32xi32>
    %cst_36 = arith.constant 1.000000e+00 : f32
    %281 = vector.broadcast %cst_36 : f32 to vector<2x32xf32>
    %282 = arith.select %280, %281, %278 : vector<2x32xi1>, vector<2x32xf32>
    %c0_37 = arith.constant 0 : index
    %c0_38 = arith.constant 0 : index
    %283 = vector.load %arg1[%c0_37, %c0_38] : memref<304x128xbf16, #tpu.memory_space<vmem>>, vector<32x128xbf16>
    %c32 = arith.constant 32 : index
    %c0_39 = arith.constant 0 : index
    %284 = vector.load %arg1[%c32, %c0_39] : memref<304x128xbf16, #tpu.memory_space<vmem>>, vector<128x128xbf16>
    %c160 = arith.constant 160 : index
    %c0_40 = arith.constant 0 : index
    %285 = vector.load %arg1[%c160, %c0_40] : memref<304x128xbf16, #tpu.memory_space<vmem>>, vector<128x128xbf16>
    %c288 = arith.constant 288 : index
    %c0_41 = arith.constant 0 : index
    %286 = vector.load %arg1[%c288, %c0_41] : memref<304x128xbf16, #tpu.memory_space<vmem>>, vector<1x128xbf16>
    %287 = arith.extf %286 : vector<1x128xbf16> to vector<1x128xf32>
    %288 = arith.truncf %282 : vector<2x32xf32> to vector<2x32xbf16>
    %cst_42 = arith.constant dense<0.000000e+00> : vector<2x128xf32>
    %289 = tpu.matmul %288, %283, %cst_42 {dimension_numbers = #tpu.dot_dimension_numbers<[1], [0], [0], [1], [0, 0, 1, 1], [], []>} : vector<2x32xbf16>, vector<32x128xbf16>, vector<2x128xf32> -> vector<2x128xf32>
    %290 = arith.truncf %289 : vector<2x128xf32> to vector<2x128xbf16>
    %cst_43 = arith.constant dense<0.000000e+00> : vector<2x128xf32>
    %291 = tpu.matmul %290, %284, %cst_43 {dimension_numbers = #tpu.dot_dimension_numbers<[1], [0], [0], [1], [0, 0, 1, 1], [], []>} : vector<2x128xbf16>, vector<128x128xbf16>, vector<2x128xf32> -> vector<2x128xf32>
    %292 = math.tanh %291 : vector<2x128xf32>
    %293 = arith.truncf %292 : vector<2x128xf32> to vector<2x128xbf16>
    %cst_44 = arith.constant dense<0.000000e+00> : vector<2x128xf32>
    %294 = tpu.matmul %293, %285, %cst_44 {dimension_numbers = #tpu.dot_dimension_numbers<[1], [0], [0], [1], [0, 0, 1, 1], [], []>} : vector<2x128xbf16>, vector<128x128xbf16>, vector<2x128xf32> -> vector<2x128xf32>
    %295 = vector.broadcast %287 : vector<1x128xf32> to vector<2x128xf32>
    %296 = arith.addf %294, %295 : vector<2x128xf32>
    %297 = tpu.iota {dimensions = array<i32: 1>} : vector<2x128xi32>
    %c2_i32 = arith.constant 2 : i32
    %298 = vector.broadcast %c2_i32 : i32 to vector<2x128xi32>
    %299 = arith.cmpi sge, %297, %298 : vector<2x128xi32>
    %c4_i32 = arith.constant 4 : i32
    %300 = vector.broadcast %c4_i32 : i32 to vector<2x128xi32>
    %301 = arith.cmpi slt, %297, %300 : vector<2x128xi32>
    %302 = arith.andi %299, %301 : vector<2x128xi1>
    %cst_45 = arith.constant -1.000000e+30 : f32
    %303 = vector.broadcast %cst_45 : f32 to vector<2x128xf32>
    %304 = arith.select %302, %296, %303 : vector<2x128xi1>, vector<2x128xf32>
    %cst_46 = arith.constant dense<0xFF800000> : vector<2xf32>
    %305 = vector.multi_reduction <maximumf>, %304, %cst_46 [1] : vector<2x128xf32> to vector<2xf32>
    %306 = vector.shape_cast %305 : vector<2xf32> to vector<2x1xf32>
    %307 = vector.broadcast %306 : vector<2x1xf32> to vector<2x128xf32>
    %308 = arith.subf %304, %307 : vector<2x128xf32>
    %309 = math.exp %308 : vector<2x128xf32>
    %cst_47 = arith.constant 0.000000e+00 : f32
    %310 = vector.broadcast %cst_47 : f32 to vector<2x128xf32>
    %311 = arith.select %302, %309, %310 : vector<2x128xi1>, vector<2x128xf32>
    %cst_48 = arith.constant dense<0.000000e+00> : vector<2xf32>
    %312 = vector.multi_reduction <add>, %311, %cst_48 [1] : vector<2x128xf32> to vector<2xf32>
    %313 = vector.shape_cast %312 : vector<2xf32> to vector<2x1xf32>
    %314 = vector.broadcast %313 : vector<2x1xf32> to vector<2x128xf32>
    %315 = arith.divf %311, %314 : vector<2x128xf32>
    %c0_49 = arith.constant 0 : index
    %c0_50 = arith.constant 0 : index
    %316 = vector.load %arg2[%c0_49, %c0_50] : memref<2x128xf32, #tpu.memory_space<vmem>>, vector<2x128xf32>
    tpu.vector_store %arg2[%c0_49, %c0_50], %315 {strides = array<i32>} : memref<2x128xf32, #tpu.memory_space<vmem>>, vector<2x128xf32>,
    %317 = vector.extract_strided_slice %296 {offsets = [0, 0], sizes = [2, 2], strides = [1, 1]} : vector<2x128xf32> to vector<2x2xf32>
    %318 = vector.extract_strided_slice %296 {offsets = [0, 2], sizes = [2, 2], strides = [1, 1]} : vector<2x128xf32> to vector<2x2xf32>
    %cst_51 = arith.constant 1.000000e+00 : f32
    %319 = vector.broadcast %cst_51 : f32 to vector<2x2xf32>
    %320 = arith.mulf %318, %319 : vector<2x2xf32>
    %cst_52 = arith.constant dense<0xFF800000> : vector<2xf32>
    %321 = vector.multi_reduction <maximumf>, %320, %cst_52 [1] : vector<2x2xf32> to vector<2xf32>
    %322 = vector.shape_cast %321 : vector<2xf32> to vector<2x1xf32>
    %323 = vector.broadcast %322 : vector<2x1xf32> to vector<2x2xf32>
    %324 = arith.subf %320, %323 : vector<2x2xf32>
    %325 = math.exp %324 : vector<2x2xf32>
    %cst_53 = arith.constant dense<0.000000e+00> : vector<2xf32>
    %326 = vector.multi_reduction <add>, %325, %cst_53 [1] : vector<2x2xf32> to vector<2xf32>
    %327 = vector.shape_cast %326 : vector<2xf32> to vector<2x1xf32>
    %328 = tpu.reciprocal %327 {approx = true} : vector<2x1xf32> -> vector<2x1xf32>
    %329 = vector.broadcast %328 : vector<2x1xf32> to vector<2x2xf32>
    %330 = arith.mulf %325, %329 : vector<2x2xf32>
    %cst_54 = arith.constant 1.000000e+00 : f32
    %331 = vector.broadcast %cst_54 : f32 to vector<2x2xf32>
    %332 = arith.mulf %317, %331 : vector<2x2xf32>
    %cst_55 = arith.constant dense<0xFF800000> : vector<2xf32>
    %333 = vector.multi_reduction <maximumf>, %332, %cst_55 [1] : vector<2x2xf32> to vector<2xf32>
    %334 = vector.shape_cast %333 : vector<2xf32> to vector<2x1xf32>
    %335 = vector.broadcast %334 : vector<2x1xf32> to vector<2x2xf32>
    %336 = arith.subf %332, %335 : vector<2x2xf32>
    %337 = math.exp %336 : vector<2x2xf32>
    %cst_56 = arith.constant dense<0.000000e+00> : vector<2xf32>
    %338 = vector.multi_reduction <add>, %337, %cst_56 [1] : vector<2x2xf32> to vector<2xf32>
    %339 = vector.shape_cast %338 : vector<2xf32> to vector<2x1xf32>
    %340 = tpu.reciprocal %339 {approx = true} : vector<2x1xf32> -> vector<2x1xf32>
    %341 = vector.broadcast %340 : vector<2x1xf32> to vector<2x2xf32>
    %342 = arith.mulf %337, %341 : vector<2x2xf32>
    %cst_57 = arith.constant dense<0xFF800000> : vector<2xf32>
    %343 = vector.multi_reduction <maximumf>, %330, %cst_57 [1] : vector<2x2xf32> to vector<2xf32>
    %344 = vector.shape_cast %343 : vector<2xf32> to vector<2x1xf32>
    %345 = vector.broadcast %344 : vector<2x1xf32> to vector<2x2xf32>
    %346 = arith.subf %330, %345 : vector<2x2xf32>
    %347 = math.exp %346 : vector<2x2xf32>
    %cst_58 = arith.constant dense<0.000000e+00> : vector<2xf32>
    %348 = vector.multi_reduction <add>, %347, %cst_58 [1] : vector<2x2xf32> to vector<2xf32>
    %349 = vector.shape_cast %348 : vector<2xf32> to vector<2x1xf32>
    %350 = math.log %349 : vector<2x1xf32>
    %351 = arith.addf %350, %344 : vector<2x1xf32>
    %352 = vector.broadcast %351 : vector<2x1xf32> to vector<2x2xf32>
    %353 = arith.subf %330, %352 : vector<2x2xf32>
    %354 = tpu.iota {dimensions = array<i32: 1>} : vector<2x2xi32>
    %355 = tpu.iota {dimensions = array<i32: 0>} : vector<2x2xi32>
    %cst_59 = arith.constant 0.000000e+00 : f32
    %356 = vector.broadcast %cst_59 : f32 to vector<2x2xf32>
    %c32_60 = arith.constant 32 : index
    %357 = memref.load %arg0[%c32_60] : memref<34xi32, #tpu.memory_space<smem>>
    %c0_i32_61 = arith.constant 0 : i32
    %358 = vector.broadcast %c0_i32_61 : i32 to vector<2x2xi32>
    %359 = arith.cmpi eq, %355, %358 : vector<2x2xi32>
    %360 = vector.broadcast %357 : i32 to vector<2x2xi32>
    %361 = arith.cmpi eq, %354, %360 : vector<2x2xi32>
    %362 = arith.andi %359, %361 : vector<2x2xi1>
    %363 = arith.extui %362 : vector<2x2xi1> to vector<2x2xi32>
    %364 = arith.sitofp %363 : vector<2x2xi32> to vector<2x2xf32>
    %365 = arith.addf %356, %364 : vector<2x2xf32>
    %c33 = arith.constant 33 : index
    %366 = memref.load %arg0[%c33] : memref<34xi32, #tpu.memory_space<smem>>
    %c1_i32_62 = arith.constant 1 : i32
    %367 = vector.broadcast %c1_i32_62 : i32 to vector<2x2xi32>
    %368 = arith.cmpi eq, %355, %367 : vector<2x2xi32>
    %369 = vector.broadcast %366 : i32 to vector<2x2xi32>
    %370 = arith.cmpi eq, %354, %369 : vector<2x2xi32>
    %371 = arith.andi %368, %370 : vector<2x2xi1>
    %372 = arith.extui %371 : vector<2x2xi1> to vector<2x2xi32>
    %373 = arith.sitofp %372 : vector<2x2xi32> to vector<2x2xf32>
    %374 = arith.addf %365, %373 : vector<2x2xf32>
    %375 = arith.mulf %374, %353 : vector<2x2xf32>
    %cst_63 = arith.constant dense<0.000000e+00> : vector<2xf32>
    %376 = vector.multi_reduction <add>, %375, %cst_63 [1] : vector<2x2xf32> to vector<2xf32>
    %377 = vector.shape_cast %376 : vector<2xf32> to vector<2x1xf32>
    %cst_64 = arith.constant 0.000000e+00 : f32
    %378 = vector.broadcast %cst_64 : f32 to vector<2x1xf32>
    %379 = arith.subf %378, %377 : vector<2x1xf32>
    %380 = arith.mulf %342, %353 : vector<2x2xf32>
    %cst_65 = arith.constant dense<0.000000e+00> : vector<2xf32>
    %381 = vector.multi_reduction <add>, %380, %cst_65 [1] : vector<2x2xf32> to vector<2xf32>
    %382 = vector.shape_cast %381 : vector<2xf32> to vector<2x1xf32>
    %cst_66 = arith.constant 0.000000e+00 : f32
    %383 = vector.broadcast %cst_66 : f32 to vector<2x1xf32>
    %384 = arith.subf %383, %382 : vector<2x1xf32>
    %385 = arith.mulf %342, %342 : vector<2x2xf32>
    %cst_67 = arith.constant dense<0.000000e+00> : vector<2xf32>
    %386 = vector.multi_reduction <add>, %385, %cst_67 [1] : vector<2x2xf32> to vector<2xf32>
    %387 = vector.shape_cast %386 : vector<2xf32> to vector<2x1xf32>
    %388 = math.sqrt %387 : vector<2x1xf32>
    %cst_68 = arith.constant 9.99999993E-9 : f32
    %389 = vector.broadcast %cst_68 : f32 to vector<2x1xf32>
    %390 = arith.maximumf %388, %389 : vector<2x1xf32>
    %391 = arith.mulf %330, %330 : vector<2x2xf32>
    %cst_69 = arith.constant dense<0.000000e+00> : vector<2xf32>
    %392 = vector.multi_reduction <add>, %391, %cst_69 [1] : vector<2x2xf32> to vector<2xf32>
    %393 = vector.shape_cast %392 : vector<2xf32> to vector<2x1xf32>
    %394 = math.sqrt %393 : vector<2x1xf32>
    %cst_70 = arith.constant 9.99999993E-9 : f32
    %395 = vector.broadcast %cst_70 : f32 to vector<2x1xf32>
    %396 = arith.maximumf %394, %395 : vector<2x1xf32>
    %397 = arith.mulf %342, %330 : vector<2x2xf32>
    %cst_71 = arith.constant dense<0.000000e+00> : vector<2xf32>
    %398 = vector.multi_reduction <add>, %397, %cst_71 [1] : vector<2x2xf32> to vector<2xf32>
    %399 = vector.shape_cast %398 : vector<2xf32> to vector<2x1xf32>
    %400 = arith.mulf %390, %396 : vector<2x1xf32>
    %401 = tpu.reciprocal %400 {approx = true} : vector<2x1xf32> -> vector<2x1xf32>
    %402 = arith.mulf %399, %401 : vector<2x1xf32>
    %cst_72 = arith.constant 1.000000e+00 : f32
    %403 = vector.broadcast %cst_72 : f32 to vector<2x1xf32>
    %404 = arith.subf %403, %402 : vector<2x1xf32>
    %405 = arith.addf %379, %384 : vector<2x1xf32>
    %406 = arith.addf %405, %404 : vector<2x1xf32>
    %407 = vector.shape_cast %406 : vector<2x1xf32> to vector<1x2x1xf32>
    %cst_73 = arith.constant dense<0.000000e+00> : vector<1xf32>
    %408 = vector.multi_reduction <add>, %407, %cst_73 [1, 2] : vector<1x2x1xf32> to vector<1xf32>
    %409 = vector.shape_cast %408 : vector<1xf32> to vector<1x1x1xf32>
    %410 = vector.extract %409[0, 0, 0] : f32 from vector<1x1x1xf32>
    %cst_74 = arith.constant 6.000000e+00 : f32
    %411 = arith.divf %410, %cst_74 : f32
    %c0_75 = arith.constant 0 : index
    %c0_76 = arith.constant 0 : index
    %412 = memref.load %arg3[%c0_75, %c0_76] : memref<1x1xf32, #tpu.memory_space<smem>>
    memref.store %411, %arg3[%c0_75, %c0_76] : memref<1x1xf32, #tpu.memory_space<smem>>
    return
  }
}

</mosaic_0001>

<llo_original>
// kernel: _forward_jit.1
$region0: #{_forward_jit.1}
  #allocation0 [shape = 'u32[]', space=smem, size = 0x4, offset = 0x4, fixed_abs, tag = 'smem constant byte address 0x4 - core index']
  #allocation1 [shape = 'u32[144,128]{1,0:T(1,128)}', space=vmem, size = 0x12000, scoped, tag = 'internal scratch']
  %s0 = inlined_call_operand.vmem [shape: s32[34], index: 0, kind: input, shape index: {}]
  %s1 = inlined_call_operand.hbm [shape: bf16[304,128], index: 1, kind: input, shape index: {}]
  %s2 = inlined_call_operand.vmem [shape: f32[2,128], index: 2, kind: output, shape index: {0}]
  %s3 = inlined_call_operand.hbm [shape: f32[1,1], index: 3, kind: output, shape index: {1}]
  %4 = xla_tuple %s2, %s3
  %s5 = sld [smem:[#allocation0]]
  $region34: #{_forward_jit.1} parent=0
    _
  %s7 = ssub.s32 1, %s5
  %s8 = scalar_select 0, %s7, %s5
  $region1: #{_forward_jit.1} parent=0
    #allocation2 [shape = 'u8[512]{0}', space=smem, size = 0x200, scoped, tag = 'input window, operand 0, single buffered']
    #allocation3 [shape = 's32[1]{0}', space=sflag, size = 0x4, scoped, tag = 'scoped memory for _forward_jit.1']
    #allocation4 [shape = 's32[1]{0}', space=sflag, size = 0x4, scoped, tag = 'scoped memory for _forward_jit.1']
    #allocation5 [shape = 's32[1]{0}', space=sflag, size = 0x4, scoped, tag = 'scoped memory for _forward_jit.1']
    #allocation6 [shape = 'u8[77824]{0}', space=vmem, size = 0x13000, scoped, tag = 'input window, operand 1, single buffered']
    #allocation7 [shape = 'u8[512]{0}', space=smem, size = 0x200, scoped, tag = 'output window, operand 1, single buffered']
    %9 = vsyncpa [#allocation5], 0
    %10 = vsyncpa [#allocation3], 0
    %11 = vsyncpa [#allocation4], 0
    // Predicated region
    $region2: #{_forward_jit.1} parent=1 // pred_check
      _
    $region3: #{_forward_jit.1} parent=1 // pred_check_branch
      %13 = sbr.rel (0) target = $region5
    $region4: #{_forward_jit.1} parent=1 // pred_region
      %s15 = ssub.s32 16, 16
      %16 = vsyncadd [#allocation5], %s15
      %s18 = sshll.u32 %s0, 4
      %s19 = int_to_ptr.vmem [resolvable:$true] %s18
      %21 = dma.vmem_to_smem %s19, 16, [#allocation2], [#allocation5]
    $region5: #{_forward_jit.1} parent=1 // pred_fallthru
      _
    // Predicated region
    $region6: #{_forward_jit.1} parent=1 // pred_check
      _
    $region7: #{_forward_jit.1} parent=1 // pred_check_branch
      %23 = sbr.rel (0) target = $region9
    $region8: #{_forward_jit.1} parent=1 // pred_region
      %s25 = ssub.s32 2432, 2432
      %26 = vsyncadd [#allocation3], %s25
      %s27 = sshll.u32 [#allocation6], 4
      %s28 = int_to_ptr.vmem [resolvable:$true] %s27
      %33 = dma.hbm_to_vmem [thread:$0]  %s1, 2432, %s28, [#allocation3], 64, 64, 4
    $region9: #{_forward_jit.1} parent=1 // pred_fallthru
      _
    // Predicated region
    $region10: #{_forward_jit.1} parent=1 // pred_check
      _
    $region11: #{_forward_jit.1} parent=1 // pred_check_branch
      %35 = sbr.rel (0) target = $region13
    $region12: #{_forward_jit.1} parent=1 // pred_region
      %36 = dma.done [#allocation5], 16
    $region13: #{_forward_jit.1} parent=1 // pred_fallthru
      _
    // Predicated region
    $region14: #{_forward_jit.1} parent=1 // pred_check
      _
    $region15: #{_forward_jit.1} parent=1 // pred_check_branch
      %38 = sbr.rel (0) target = $region17
    $region16: #{_forward_jit.1} parent=1 // pred_region
      %39 = dma.done [#allocation3], 2432
    $region17: #{_forward_jit.1} parent=1 // pred_fallthru
      _
    %40 = sfence
    %v42 = vlaneseq
    %v43 = vand.u32 %v42, 127
    %v44 = vlaneseq
    %v45 = vshrl.u32 %v44, 7
    %s46 = sld [smem:[#allocation2 + $0x10]]
    %s47 = scvt.s32.f32 %s46
    %s48 = sadd.f32 %s47, 0.0
    %s49 = sld [smem:[#allocation2 + $0x11]]
    %s50 = scvt.s32.f32 %s49
    %s51 = sadd.f32 %s48, %s50
    %s52 = sld [smem:[#allocation2 + $0x12]]
    %s53 = scvt.s32.f32 %s52
    %s54 = sadd.f32 %s51, %s53
    %s55 = sld [smem:[#allocation2 + $0x13]]
    %s56 = scvt.s32.f32 %s55
    %s57 = sadd.f32 %s54, %s56
    %s58 = sld [smem:[#allocation2 + $0x14]]
    %s59 = scvt.s32.f32 %s58
    %s60 = sadd.f32 %s57, %s59
    %s61 = sld [smem:[#allocation2 + $0x15]]
    %s62 = scvt.s32.f32 %s61
    %s63 = sadd.f32 %s60, %s62
    %s64 = sld [smem:[#allocation2 + $0x16]]
    %s65 = scvt.s32.f32 %s64
    %s66 = sadd.f32 %s63, %s65
    %s67 = sld [smem:[#allocation2 + $0x17]]
    %s68 = scvt.s32.f32 %s67
    %s69 = sadd.f32 %s66, %s68
    %s70 = smax.f32 %s69, 1.0
    %v71 = vstv %s70
    %v72 = vrcp.pop %v71
    %s73 = vtos %v72
    %s74 = sld [smem:[#allocation2]]
    %s75 = smul.f32 %s47, %s73
    %vm76 = vcmp.eq.s32.totalorder %v45, 0
    %v77 = vstv %s74
    %vm78 = vcmp.eq.s32.totalorder %v43, %v77
    %vm79 = vmand %vm76, %vm78
    %v80 = vsel %vm79, 1, 0
    %v81 = vcvt.s32.f32 %v80
    %v82 = vstv %s75
    %v83 = vmul.f32 %v81, %v82
    %v84 = vadd.f32 %v83, 0.0
    %s85 = sld [smem:[#allocation2 + $0x1]]
    %s86 = smul.f32 %s50, %s73
    %v87 = vstv %s85
    %vm88 = vcmp.eq.s32.totalorder %v43, %v87
    %vm89 = vmand %vm76, %vm88
    %v90 = vsel %vm89, 1, 0
    %v91 = vcvt.s32.f32 %v90
    %v92 = vstv %s86
    %v93 = vmul.f32 %v91, %v92
    %v94 = vadd.f32 %v84, %v93
    %s95 = sld [smem:[#allocation2 + $0x2]]
    %s96 = smul.f32 %s53, %s73
    %v97 = vstv %s95
    %vm98 = vcmp.eq.s32.totalorder %v43, %v97
    %vm99 = vmand %vm76, %vm98
    %v100 = vsel %vm99, 1, 0
    %v101 = vcvt.s32.f32 %v100
    %v102 = vstv %s96
    %v103 = vmul.f32 %v101, %v102
    %v104 = vadd.f32 %v94, %v103
    %s105 = sld [smem:[#allocation2 + $0x3]]
    %s106 = smul.f32 %s56, %s73
    %v107 = vstv %s105
    %vm108 = vcmp.eq.s32.totalorder %v43, %v107
    %vm109 = vmand %vm76, %vm108
    %v110 = vsel %vm109, 1, 0
    %v111 = vcvt.s32.f32 %v110
    %v112 = vstv %s106
    %v113 = vmul.f32 %v111, %v112
    %v114 = vadd.f32 %v104, %v113
    %s115 = sld [smem:[#allocation2 + $0x4]]
    %s116 = smul.f32 %s59, %s73
    %v117 = vstv %s115
    %vm118 = vcmp.eq.s32.totalorder %v43, %v117
    %vm119 = vmand %vm76, %vm118
    %v120 = vsel %vm119, 1, 0
    %v121 = vcvt.s32.f32 %v120
    %v122 = vstv %s116
    %v123 = vmul.f32 %v121, %v122
    %v124 = vadd.f32 %v114, %v123
    %s125 = sld [smem:[#allocation2 + $0x5]]
    %s126 = smul.f32 %s62, %s73
    %v127 = vstv %s125
    %vm128 = vcmp.eq.s32.totalorder %v43, %v127
    %vm129 = vmand %vm76, %vm128
    %v130 = vsel %vm129, 1, 0
    %v131 = vcvt.s32.f32 %v130
    %v132 = vstv %s126
    %v133 = vmul.f32 %v131, %v132
    %v134 = vadd.f32 %v124, %v133
    %s135 = sld [smem:[#allocation2 + $0x6]]
    %s136 = smul.f32 %s65, %s73
    %v137 = vstv %s135
    %vm138 = vcmp.eq.s32.totalorder %v43, %v137
    %vm139 = vmand %vm76, %vm138
    %v140 = vsel %vm139, 1, 0
    %v141 = vcvt.s32.f32 %v140
    %v142 = vstv %s136
    %v143 = vmul.f32 %v141, %v142
    %v144 = vadd.f32 %v134, %v143
    %s145 = sld [smem:[#allocation2 + $0x7]]
    %s146 = smul.f32 %s68, %s73
    %v147 = vstv %s145
    %vm148 = vcmp.eq.s32.totalorder %v43, %v147
    %vm149 = vmand %vm76, %vm148
    %v150 = vsel %vm149, 1, 0
    %v151 = vcvt.s32.f32 %v150
    %v152 = vstv %s146
    %v153 = vmul.f32 %v151, %v152
    %v154 = vadd.f32 %v144, %v153
    %s155 = sld [smem:[#allocation2 + $0x18]]
    %s156 = scvt.s32.f32 %s155
    %s157 = sadd.f32 %s156, 0.0
    %s158 = sld [smem:[#allocation2 + $0x19]]
    %s159 = scvt.s32.f32 %s158
    %s160 = sadd.f32 %s157, %s159
    %s161 = sld [smem:[#allocation2 + $0x1a]]
    %s162 = scvt.s32.f32 %s161
    %s163 = sadd.f32 %s160, %s162
    %s164 = sld [smem:[#allocation2 + $0x1b]]
    %s165 = scvt.s32.f32 %s164
    %s166 = sadd.f32 %s163, %s165
    %s167 = sld [smem:[#allocation2 + $0x1c]]
    %s168 = scvt.s32.f32 %s167
    %s169 = sadd.f32 %s166, %s168
    %s170 = sld [smem:[#allocation2 + $0x1d]]
    %s171 = scvt.s32.f32 %s170
    %s172 = sadd.f32 %s169, %s171
    %s173 = sld [smem:[#allocation2 + $0x1e]]
    %s174 = scvt.s32.f32 %s173
    %s175 = sadd.f32 %s172, %s174
    %s176 = sld [smem:[#allocation2 + $0x1f]]
    %s177 = scvt.s32.f32 %s176
    %s178 = sadd.f32 %s175, %s177
    %s179 = smax.f32 %s178, 1.0
    %v180 = vstv %s179
    %v181 = vrcp.pop %v180
    %s182 = vtos %v181
    %s183 = sld [smem:[#allocation2 + $0x8]]
    %s184 = smul.f32 %s156, %s182
    %vm185 = vcmp.eq.s32.totalorder %v45, 1
    %v186 = vstv %s183
    %vm187 = vcmp.eq.s32.totalorder %v43, %v186
    %vm188 = vmand %vm185, %vm187
    %v189 = vsel %vm188, 1, 0
    %v190 = vcvt.s32.f32 %v189
    %v191 = vstv %s184
    %v192 = vmul.f32 %v190, %v191
    %v193 = vadd.f32 %v154, %v192
    %s194 = sld [smem:[#allocation2 + $0x9]]
    %s195 = smul.f32 %s159, %s182
    %v196 = vstv %s194
    %vm197 = vcmp.eq.s32.totalorder %v43, %v196
    %vm198 = vmand %vm185, %vm197
    %v199 = vsel %vm198, 1, 0
    %v200 = vcvt.s32.f32 %v199
    %v201 = vstv %s195
    %v202 = vmul.f32 %v200, %v201
    %v203 = vadd.f32 %v193, %v202
    %s204 = sld [smem:[#allocation2 + $0xa]]
    %s205 = smul.f32 %s162, %s182
    %v206 = vstv %s204
    %vm207 = vcmp.eq.s32.totalorder %v43, %v206
    %vm208 = vmand %vm185, %vm207
    %v209 = vsel %vm208, 1, 0
    %v210 = vcvt.s32.f32 %v209
    %v211 = vstv %s205
    %v212 = vmul.f32 %v210, %v211
    %v213 = vadd.f32 %v203, %v212
    %s214 = sld [smem:[#allocation2 + $0xb]]
    %s215 = smul.f32 %s165, %s182
    %v216 = vstv %s214
    %vm217 = vcmp.eq.s32.totalorder %v43, %v216
    %vm218 = vmand %vm185, %vm217
    %v219 = vsel %vm218, 1, 0
    %v220 = vcvt.s32.f32 %v219
    %v221 = vstv %s215
    %v222 = vmul.f32 %v220, %v221
    %v223 = vadd.f32 %v213, %v222
    %s224 = sld [smem:[#allocation2 + $0xc]]
    %s225 = smul.f32 %s168, %s182
    %v226 = vstv %s224
    %vm227 = vcmp.eq.s32.totalorder %v43, %v226
    %vm228 = vmand %vm185, %vm227
    %v229 = vsel %vm228, 1, 0
    %v230 = vcvt.s32.f32 %v229
    %v231 = vstv %s225
    %v232 = vmul.f32 %v230, %v231
    %v233 = vadd.f32 %v223, %v232
    %s234 = sld [smem:[#allocation2 + $0xd]]
    %s235 = smul.f32 %s171, %s182
    %v236 = vstv %s234
    %vm237 = vcmp.eq.s32.totalorder %v43, %v236
    %vm238 = vmand %vm185, %vm237
    %v239 = vsel %vm238, 1, 0
    %v240 = vcvt.s32.f32 %v239
    %v241 = vstv %s235
    %v242 = vmul.f32 %v240, %v241
    %v243 = vadd.f32 %v233, %v242
    %s244 = sld [smem:[#allocation2 + $0xe]]
    %s245 = smul.f32 %s174, %s182
    %v246 = vstv %s244
    %vm247 = vcmp.eq.s32.totalorder %v43, %v246
    %vm248 = vmand %vm185, %vm247
    %v249 = vsel %vm248, 1, 0
    %v250 = vcvt.s32.f32 %v249
    %v251 = vstv %s245
    %v252 = vmul.f32 %v250, %v251
    %v253 = vadd.f32 %v243, %v252
    %s254 = sld [smem:[#allocation2 + $0xf]]
    %s255 = smul.f32 %s177, %s182
    %v256 = vstv %s254
    %vm257 = vcmp.eq.s32.totalorder %v43, %v256
    %vm258 = vmand %vm185, %vm257
    %v259 = vsel %vm258, 1, 0
    %v260 = vcvt.s32.f32 %v259
    %v261 = vstv %s255
    %v262 = vmul.f32 %v260, %v261
    %v263 = vadd.f32 %v253, %v262
    %vm264 = vcmp.eq.s32.totalorder %v43, 30
    %v265 = vsel %vm264, 1.0, %v263
    %v266 = vld [vmem:[#allocation6] sm:$0xf]
    %v267 = vld [vmem:[#allocation6 + $0x4] sm:$0xf]
    %v268 = vld [vmem:[#allocation6 + $0x8] sm:$0xf]
    %v269 = vld [vmem:[#allocation6 + $0xc] sm:$0xf]
    %v270 = vld [vmem:[#allocation6 + $0x10] sm:$0xf]
    %v271 = vld [vmem:[#allocation6 + $0x14] sm:$0xf]
    %v272 = vld [vmem:[#allocation6 + $0x18] sm:$0xf]
    %v273 = vld [vmem:[#allocation6 + $0x1c] sm:$0xf]
    %v274 = vld [vmem:[#allocation6 + $0x20] sm:$0xf]
    %v275 = vld [vmem:[#allocation6 + $0x24] sm:$0xf]
    %v276 = vld [vmem:[#allocation6 + $0x28] sm:$0xf]
    %v277 = vld [vmem:[#allocation6 + $0x2c] sm:$0xf]
    %v278 = vld [vmem:[#allocation6 + $0x30] sm:$0xf]
    %v279 = vld [vmem:[#allocation6 + $0x34] sm:$0xf]
    %v280 = vld [vmem:[#allocation6 + $0x38] sm:$0xf]
    %v281 = vld [vmem:[#allocation6 + $0x3c] sm:$0xf]
    %v282 = vld [vmem:[#allocation6 + $0x40] sm:$0xf]
    %v283 = vld [vmem:[#allocation6 + $0x44] sm:$0xf]
    %v284 = vld [vmem:[#allocation6 + $0x48] sm:$0xf]
    %v285 = vld [vmem:[#allocation6 + $0x4c] sm:$0xf]
    %v286 = vld [vmem:[#allocation6 + $0x50] sm:$0xf]
    %v287 = vld [vmem:[#allocation6 + $0x54] sm:$0xf]
    %v288 = vld [vmem:[#allocation6 + $0x58] sm:$0xf]
    %v289 = vld [vmem:[#allocation6 + $0x5c] sm:$0xf]
    %v290 = vld [vmem:[#allocation6 + $0x60] sm:$0xf]
    %v291 = vld [vmem:[#allocation6 + $0x64] sm:$0xf]
    %v292 = vld [vmem:[#allocation6 + $0x68] sm:$0xf]
    %v293 = vld [vmem:[#allocation6 + $0x6c] sm:$0xf]
    %v294 = vld [vmem:[#allocation6 + $0x70] sm:$0xf]
    %v295 = vld [vmem:[#allocation6 + $0x74] sm:$0xf]
    %v296 = vld [vmem:[#allocation6 + $0x78] sm:$0xf]
    %v297 = vld [vmem:[#allocation6 + $0x7c] sm:$0xf]
    %v298 = vld [vmem:[#allocation6 + $0x80] sm:$0xf]
    %v299 = vld [vmem:[#allocation6 + $0x84] sm:$0xf]
    %v300 = vld [vmem:[#allocation6 + $0x88] sm:$0xf]
    %v301 = vld [vmem:[#allocation6 + $0x8c] sm:$0xf]
    %v302 = vld [vmem:[#allocation6 + $0x90] sm:$0x1]
    %v303 = vunpack.c.l.bf16 %v302
    %v304 = vpack.c.bf16 %v265, %v265
    %v309 = vunpack.c.l.b16 %v266
    %v310 = vunpack.c.l.b16 %v267
    %v311 = vunpack.c.l.b16 %v268
    %v312 = vunpack.c.l.b16 %v269
    %v313 = vpack.c.b16 %v310, %v309
    %v314 = vpack.c.b16 %v312, %v311
    %vm317 = vcmask 261120
    %v319 = vsel %vm317, %v304, 0
    %321 = vmatprep.subr.bf16.mxu0 0
    %322 = vmatpush1.bf16.msra.mxu0 %v313
    %323 = vmatprep.subr.bf16.mxu0 0
    %324 = vmatpush1.bf16.msra.mxu0 %v314
    %325 = vmatprep.subr.bf16.mxu0 0
    %326 = vmatpush1.bf16.msra.mxu0 0
    %327 = vmatprep.subr.bf16.mxu0 0
    %328 = vmatpush1.bf16.msra.mxu0 0
    %329 = vmatprep.subr.bf16.mxu0 0
    %330 = vmatpush1.bf16.msra.mxu0 0
    %331 = vmatprep.subr.bf16.mxu0 0
    %332 = vmatpush1.bf16.msra.mxu0 0
    %333 = vmatprep.subr.bf16.mxu0 0
    %334 = vmatpush1.bf16.msra.mxu0 0
    %335 = vmatprep.subr.bf16.mxu0 0
    %336 = vmatpush1.bf16.msra.mxu0 0
    %337 = vmatprep.subr.bf16.mxu0 0
    %338 = vmatpush1.bf16.msra.mxu0 0
    %339 = vmatprep.subr.bf16.mxu0 0
    %340 = vmatpush1.bf16.msra.mxu0 0
    %341 = vmatprep.subr.bf16.mxu0 0
    %342 = vmatpush1.bf16.msra.mxu0 0
    %343 = vmatprep.subr.bf16.mxu0 0
    %344 = vmatpush1.bf16.msra.mxu0 0
    %345 = vmatprep.subr.bf16.mxu0 0
    %346 = vmatpush1.bf16.msra.mxu0 0
    %347 = vmatprep.subr.bf16.mxu0 0
    %348 = vmatpush1.bf16.msra.mxu0 0
    %349 = vmatprep.subr.bf16.mxu0 0
    %350 = vmatpush1.bf16.msra.mxu0 0
    %351 = vmatprep.subr.bf16.mxu0 0
    %352 = vmatpush1.bf16.msra.mxu0 0
    %353 = vmatprep.mubr.bf16.mxu0 0
    %354 = vmatmul.mubr.bf16.gmra.mrb[0].mxu0 %v319
    %v355 = vpop.f32.mrb[0].mxu0
    %v356 = vadd.f32 0.0, %v355
    %v357 = vpop.f32.mrb[0].mxu0
    %v358 = vpop.f32.mrb[0].mxu0
    %v359 = vpop.f32.mrb[0].mxu0
    %360 = vdwg.mxu0
    %v361 = vpack.c.bf16 %v356, %v356
    %v378 = vunpack.c.l.b16 %v270
    %v379 = vunpack.c.l.b16 %v271
    %v380 = vunpack.c.l.b16 %v272
    %v381 = vunpack.c.l.b16 %v273
    %v382 = vunpack.c.l.b16 %v274
    %v383 = vunpack.c.l.b16 %v275
    %v384 = vunpack.c.l.b16 %v276
    %v385 = vunpack.c.l.b16 %v277
    %v386 = vunpack.c.l.b16 %v278
    %v387 = vunpack.c.l.b16 %v279
    %v388 = vunpack.c.l.b16 %v280
    %v389 = vunpack.c.l.b16 %v281
    %v390 = vunpack.c.l.b16 %v282
    %v391 = vunpack.c.l.b16 %v283
    %v392 = vunpack.c.l.b16 %v284
    %v393 = vunpack.c.l.b16 %v285
    %v394 = vpack.c.b16 %v379, %v378
    %v395 = vpack.c.b16 %v381, %v380
    %v396 = vpack.c.b16 %v383, %v382
    %v397 = vpack.c.b16 %v385, %v384
    %v398 = vpack.c.b16 %v387, %v386
    %v399 = vpack.c.b16 %v389, %v388
    %v400 = vpack.c.b16 %v391, %v390
    %v401 = vpack.c.b16 %v393, %v392
    %410 = vmatprep.subr.bf16.mxu0 0
    %411 = vmatpush1.bf16.msra.mxu0 %v394
    %412 = vmatprep.subr.bf16.mxu0 0
    %413 = vmatpush1.bf16.msra.mxu0 %v395
    %414 = vmatprep.subr.bf16.mxu0 0
    %415 = vmatpush1.bf16.msra.mxu0 %v396
    %416 = vmatprep.subr.bf16.mxu0 0
    %417 = vmatpush1.bf16.msra.mxu0 %v397
    %418 = vmatprep.subr.bf16.mxu0 0
    %419 = vmatpush1.bf16.msra.mxu0 %v398
    %420 = vmatprep.subr.bf16.mxu0 0
    %421 = vmatpush1.bf16.msra.mxu0 %v399
    %422 = vmatprep.subr.bf16.mxu0 0
    %423 = vmatpush1.bf16.msra.mxu0 %v400
    %424 = vmatprep.subr.bf16.mxu0 0
    %425 = vmatpush1.bf16.msra.mxu0 %v401
    %426 = vmatprep.subr.bf16.mxu0 0
    %427 = vmatpush1.bf16.msra.mxu0 0
    %428 = vmatprep.subr.bf16.mxu0 0
    %429 = vmatpush1.bf16.msra.mxu0 0
    %430 = vmatprep.subr.bf16.mxu0 0
    %431 = vmatpush1.bf16.msra.mxu0 0
    %432 = vmatprep.subr.bf16.mxu0 0
    %433 = vmatpush1.bf16.msra.mxu0 0
    %434 = vmatprep.subr.bf16.mxu0 0
    %435 = vmatpush1.bf16.msra.mxu0 0
    %436 = vmatprep.subr.bf16.mxu0 0
    %437 = vmatpush1.bf16.msra.mxu0 0
    %438 = vmatprep.subr.bf16.mxu0 0
    %439 = vmatpush1.bf16.msra.mxu0 0
    %440 = vmatprep.subr.bf16.mxu0 0
    %441 = vmatpush1.bf16.msra.mxu0 0
    %442 = vmatprep.mubr.bf16.mxu0 0
    %443 = vmatmul.mubr.bf16.gmra.mrb[0].mxu0 %v361
    %v444 = vpop.f32.mrb[0].mxu0
    %v445 = vadd.f32 0.0, %v444
    %v446 = vpop.f32.mrb[0].mxu0
    %v447 = vpop.f32.mrb[0].mxu0
    %v448 = vpop.f32.mrb[0].mxu0
    %449 = vdwg.mxu0
    %v450 = vtanh.pop %v445
    %v451 = vpack.c.bf16 %v450, %v450
    %v452 = vlaneseq
    %v453 = vshrl.u32 %v452, 7
    %v454 = vsub.s32 0, %v453
    %v455 = vrot.slane %v303, %v454
    %v472 = vunpack.c.l.b16 %v286
    %v473 = vunpack.c.l.b16 %v287
    %v474 = vunpack.c.l.b16 %v288
    %v475 = vunpack.c.l.b16 %v289
    %v476 = vunpack.c.l.b16 %v290
    %v477 = vunpack.c.l.b16 %v291
    %v478 = vunpack.c.l.b16 %v292
    %v479 = vunpack.c.l.b16 %v293
    %v480 = vunpack.c.l.b16 %v294
    %v481 = vunpack.c.l.b16 %v295
    %v482 = vunpack.c.l.b16 %v296
    %v483 = vunpack.c.l.b16 %v297
    %v484 = vunpack.c.l.b16 %v298
    %v485 = vunpack.c.l.b16 %v299
    %v486 = vunpack.c.l.b16 %v300
    %v487 = vunpack.c.l.b16 %v301
    %v488 = vpack.c.b16 %v473, %v472
    %v489 = vpack.c.b16 %v475, %v474
    %v490 = vpack.c.b16 %v477, %v476
    %v491 = vpack.c.b16 %v479, %v478
    %v492 = vpack.c.b16 %v481, %v480
    %v493 = vpack.c.b16 %v483, %v482
    %v494 = vpack.c.b16 %v485, %v484
    %v495 = vpack.c.b16 %v487, %v486
    %504 = vmatprep.subr.bf16.mxu0 0
    %505 = vmatpush1.bf16.msra.mxu0 %v488
    %506 = vmatprep.subr.bf16.mxu0 0
    %507 = vmatpush1.bf16.msra.mxu0 %v489
    %508 = vmatprep.subr.bf16.mxu0 0
    %509 = vmatpush1.bf16.msra.mxu0 %v490
    %510 = vmatprep.subr.bf16.mxu0 0
    %511 = vmatpush1.bf16.msra.mxu0 %v491
    %512 = vmatprep.subr.bf16.mxu0 0
    %513 = vmatpush1.bf16.msra.mxu0 %v492
    %514 = vmatprep.subr.bf16.mxu0 0
    %515 = vmatpush1.bf16.msra.mxu0 %v493
    %516 = vmatprep.subr.bf16.mxu0 0
    %517 = vmatpush1.bf16.msra.mxu0 %v494
    %518 = vmatprep.subr.bf16.mxu0 0
    %519 = vmatpush1.bf16.msra.mxu0 %v495
    %520 = vmatprep.subr.bf16.mxu0 0
    %521 = vmatpush1.bf16.msra.mxu0 0
    %522 = vmatprep.subr.bf16.mxu0 0
    %523 = vmatpush1.bf16.msra.mxu0 0
    %524 = vmatprep.subr.bf16.mxu0 0
    %525 = vmatpush1.bf16.msra.mxu0 0
    %526 = vmatprep.subr.bf16.mxu0 0
    %527 = vmatpush1.bf16.msra.mxu0 0
    %528 = vmatprep.subr.bf16.mxu0 0
    %529 = vmatpush1.bf16.msra.mxu0 0
    %530 = vmatprep.subr.bf16.mxu0 0
    %531 = vmatpush1.bf16.msra.mxu0 0
    %532 = vmatprep.subr.bf16.mxu0 0
    %533 = vmatpush1.bf16.msra.mxu0 0
    %534 = vmatprep.subr.bf16.mxu0 0
    %535 = vmatpush1.bf16.msra.mxu0 0
    %536 = vmatprep.mubr.bf16.mxu0 0
    %537 = vmatmul.mubr.bf16.gmra.mrb[0].mxu0 %v451
    %v538 = vpop.f32.mrb[0].mxu0
    %v539 = vadd.f32 %v455, %v538
    %v540 = vpop.f32.mrb[0].mxu0
    %v541 = vpop.f32.mrb[0].mxu0
    %v542 = vpop.f32.mrb[0].mxu0
    %543 = vdwg.mxu0
    %vm544 = vcmp.ge.s32.totalorder %v43, 2
    %vm545 = vcmp.lt.s32.totalorder %v43, 4
    %vm546 = vmand %vm544, %vm545
    %v547 = vsel %vm546, %v539, -1e+30
    %vm548 = vcmask 1041408
    %v549 = vsel %vm548, %v547, -inf
    %550 = vmax.xlane.f32.xlu0 %v549
    %v551 = vpop.xlane.xlu0 %550
    %v552 = vsub.f32 %v547, %v551
    %v553 = vmul.f32 %v552, 1.442695
    %v554 = vpow.pop %v553
    %v555 = vsel %vm546, %v554, 0.0
    %v556 = vsel %vm548, %v555, 0.0
    %557 = vadd.xlane.f32.xlu0 %v556
    %v558 = vpop.xlane.xlu0 %557
    %v559 = vrcp.pop %v558
    %v560 = vmul.f32 %v555, %v559
    %561 = vst [vmem:[%s2] sm:$0x3] %v560
    %vm562 = vcmask 25616
    %v563 = vsel %vm562, %v539, -inf
    %564 = vmax.xlane.f32.xlu0 %v563
    %v565 = vpop.xlane.xlu0 %564
    %v566 = vsub.f32 %v539, %v565
    %v567 = vmul.f32 %v566, 1.442695
    %v568 = vpow.pop %v567
    %570 = vrot.lane.b32.xlu0 %v568, 126
    %v571 = vpop.permute.xlu0 %570
    %vm573 = vcmask 9216
    %v574 = vsel %vm573, %v571, 0.0
    %575 = vadd.xlane.f32.xlu0 %v574
    %v576 = vpop.xlane.xlu0 %575
    %v577 = vrcp.pop %v576
    %v578 = vmul.f32 %v568, %v577
    %v579 = vsel %vm573, %v539, -inf
    %580 = vmax.xlane.f32.xlu0 %v579
    %v581 = vpop.xlane.xlu0 %580
    %v582 = vsub.f32 %v539, %v581
    %v583 = vmul.f32 %v582, 1.442695
    %v584 = vpow.pop %v583
    %v585 = vsel %vm573, %v584, 0.0
    %586 = vadd.xlane.f32.xlu0 %v585
    %v587 = vpop.xlane.xlu0 %586
    %v588 = vrcp.pop %v587
    %v589 = vmul.f32 %v584, %v588
    %v590 = vsel %vm562, %v578, -inf
    %591 = vmax.xlane.f32.xlu0 %v590
    %v592 = vpop.xlane.xlu0 %591
    %v593 = vsub.f32 %v578, %v592
    %v594 = vmul.f32 %v593, 1.442695
    %v595 = vpow.pop %v594
    %597 = vrot.lane.b32.xlu0 %v595, 126
    %v598 = vpop.permute.xlu0 %597
    %v600 = vsel %vm573, %v598, 0.0
    %601 = vadd.xlane.f32.xlu0 %v600
    %v602 = vpop.xlane.xlu0 %601
    %v603 = vlog2.pop %v602
    %v604 = vmul.f32 %v603, 0.6931472
    %v605 = vadd.f32 %v604, %v592
    %v606 = vsub.f32 %v578, %v605
    %s607 = sld [smem:[#allocation2 + $0x20]]
    %v608 = vstv %s607
    %vm609 = vcmp.eq.s32.totalorder %v43, %v608
    %vm610 = vmand %vm76, %vm609
    %v611 = vsel %vm610, 1, 0
    %v612 = vcvt.s32.f32 %v611
    %v613 = vadd.f32 %v612, 0.0
    %s614 = sld [smem:[#allocation2 + $0x21]]
    %v615 = vstv %s614
    %vm616 = vcmp.eq.s32.totalorder %v43, %v615
    %vm617 = vmand %vm185, %vm616
    %v618 = vsel %vm617, 1, 0
    %v619 = vcvt.s32.f32 %v618
    %v620 = vadd.f32 %v613, %v619
    %622 = vrot.lane.b32.xlu0 %v606, 126
    %v623 = vpop.permute.xlu0 %622
    %v625 = vmul.f32 %v620, %v623
    %v626 = vsel %vm573, %v625, 0.0
    %627 = vadd.xlane.f32.xlu0 %v626
    %v628 = vpop.xlane.xlu0 %627
    %v629 = vsub.f32 0.0, %v628
    %v630 = vmul.f32 %v589, %v623
    %v631 = vsel %vm573, %v630, 0.0
    %632 = vadd.xlane.f32.xlu0 %v631
    %v633 = vpop.xlane.xlu0 %632
    %v634 = vsub.f32 0.0, %v633
    %v635 = vmul.f32 %v589, %v589
    %v636 = vsel %vm573, %v635, 0.0
    %637 = vadd.xlane.f32.xlu0 %v636
    %v638 = vpop.xlane.xlu0 %637
    %v639 = vrsqrt.pop %v638
    %v640 = vmul.f32 %v638, %v639
    %vm641 = vcmp.eq.f32.partialorder %v638, inf
    %v642 = vsel %vm641, %v638, %v640
    %vm643 = vcmp.eq.f32.partialorder %v638, 0.0
    %v644 = vand.u32 %v638, 2147483648
    %v645 = vsel %vm643, %v644, %v642
    %v646 = vmax.f32 %v645, 1e-08
    %v647 = vmul.f32 %v578, %v578
    %649 = vrot.lane.b32.xlu0 %v647, 126
    %v650 = vpop.permute.xlu0 %649
    %v652 = vsel %vm573, %v650, 0.0
    %653 = vadd.xlane.f32.xlu0 %v652
    %v654 = vpop.xlane.xlu0 %653
    %v655 = vrsqrt.pop %v654
    %v656 = vmul.f32 %v654, %v655
    %vm657 = vcmp.eq.f32.partialorder %v654, inf
    %v658 = vsel %vm657, %v654, %v656
    %vm659 = vcmp.eq.f32.partialorder %v654, 0.0
    %v660 = vand.u32 %v654, 2147483648
    %v661 = vsel %vm659, %v660, %v658
    %v662 = vmax.f32 %v661, 1e-08
    %664 = vrot.lane.b32.xlu0 %v578, 126
    %v665 = vpop.permute.xlu0 %664
    %v667 = vmul.f32 %v589, %v665
    %v668 = vsel %vm573, %v667, 0.0
    %669 = vadd.xlane.f32.xlu0 %v668
    %v670 = vpop.xlane.xlu0 %669
    %v671 = vmul.f32 %v646, %v662
    %v672 = vrcp.pop %v671
    %v673 = vmul.f32 %v670, %v672
    %v674 = vsub.f32 1.0, %v673
    %v675 = vadd.f32 %v629, %v634
    %v676 = vadd.f32 %v675, %v674
    %vm677 = vcmask 1024
    %v678 = vsel %vm677, %v676, 0.0
    %679 = vadd.xlane.f32.xlu0 %v678
    %v680 = vpop.xlane.xlu0 %679
    %v681 = vrot.slane %v680, 4
    %v682 = vadd.f32 %v680, %v681
    %v683 = vrot.slane %v682, 2
    %v684 = vadd.f32 %v682, %v683
    %v685 = vrot.slane %v684, 1
    %v686 = vadd.f32 %v684, %v685
    %s687 = vtos %v686
    %v688 = vrcp.pop 6.0
    %s689 = vtos %v688
    %s690 = smul.f32 %s687, %s689
    %s691 = scalar_lea.smem [#allocation7], 0
    %692 = sst [smem:[%s691]] %s690
    // Predicated region
    $region18: #{_forward_jit.1} parent=1 // pred_check
      _
    $region19: #{_forward_jit.1} parent=1 // pred_check_branch
      %694 = sbr.rel (0) target = $region21
    $region20: #{_forward_jit.1} parent=1 // pred_region
      _
    $region21: #{_forward_jit.1} parent=1 // pred_fallthru
      _
    // Predicated region
    $region22: #{_forward_jit.1} parent=1 // pred_check
      _
    $region23: #{_forward_jit.1} parent=1 // pred_check_branch
      %696 = sbr.rel (0) target = $region25
    $region24: #{_forward_jit.1} parent=1 // pred_region
      %s698 = ssub.s32 16, 16
      %699 = vsyncadd [#allocation4], %s698
      %702 = dma.smem_to_hbm [#allocation7], 16, %s3, [#allocation4]
    $region25: #{_forward_jit.1} parent=1 // pred_fallthru
      _
    // Predicated region
    $region26: #{_forward_jit.1} parent=1 // pred_check
      _
    $region27: #{_forward_jit.1} parent=1 // pred_check_branch
      %704 = sbr.rel (0) target = $region29
    $region28: #{_forward_jit.1} parent=1 // pred_region
      _
    $region29: #{_forward_jit.1} parent=1 // pred_fallthru
      _
    // Predicated region
    $region30: #{_forward_jit.1} parent=1 // pred_check
      _
    $region31: #{_forward_jit.1} parent=1 // pred_check_branch
      %706 = sbr.rel (0) target = $region33
    $region32: #{_forward_jit.1} parent=1 // pred_region
      %707 = dma.done [#allocation4], 16
    $region33: #{_forward_jit.1} parent=1 // pred_fallthru
      _
    %708 = sfence
    %709 = vsyncpa [#allocation3], 1
    %710 = vsyncpa [#allocation4], 1
    %711 = vsyncpa [#allocation5], 1

</llo_original>
